<compile_context>
chip_gen: v6e
topology: v6e:2x2x1
jax: 0.10.0
libtpu: 0.0.40
codegen_flags: <defaults>
</compile_context>

<pallas_src>
import jax
import jax.numpy as jnp
from jax.experimental import pallas as pl
from jax.experimental.pallas import tpu as pltpu

LANE = 128      # vreg lane width
SUBLANE = 8     # vreg sublane count


def _round_up(n, m):
    return ((n + m - 1) // m) * m


def mlp_kernel(x_ref, w1_ref, b1_ref, w2_ref, b2_ref, w3_ref, b3_ref, o_ref):
    # x_ref: (tm, in_f) true-width input tile; weights/biases zero-padded to 128 lanes
    # (exact under ReLU). Three MXU matmuls with f32 accumulation, bias + ReLU on VPU.
    x = x_ref[...]
    h1 = jnp.dot(x, w1_ref[...], preferred_element_type=jnp.float32) + b1_ref[...]
    h1 = jnp.maximum(h1, 0.0)
    h2 = jnp.dot(h1, w2_ref[...], preferred_element_type=jnp.float32) + b2_ref[...]
    h2 = jnp.maximum(h2, 0.0)
    out = jnp.dot(h2, w3_ref[...], preferred_element_type=jnp.float32) + b3_ref[...]
    # Store only the true output columns (lane-masked vst) -> no padded HBM writeback.
    o_ref[...] = out[:, : o_ref.shape[1]].astype(o_ref.dtype)


def mlp_forward(x, params, *, max_block_batch=4096):
    """x: (B, in_features) f32. params: (w1,b1,w2,b2,w3,b3) with w_i (in, out), b_i (1, out)."""
    w1, b1, w2, b2, w3, b3 = params
    B, in_f = x.shape
    h1_f, h2_f, out_f = w1.shape[1], w2.shape[1], w3.shape[1]

    # Pad hidden / output feature dims of the (tiny, VMEM-resident) weights to 128
    # lanes so every matmul is lane-dense. Zero padding is exact: padded weight
    # rows/cols and bias entries are 0 and ReLU(0)=0.
    h1_p = _round_up(h1_f, LANE)
    h2_p = _round_up(h2_f, LANE)
    out_p = _round_up(out_f, LANE)

    f32 = jnp.float32
    w1p = jnp.zeros((in_f, h1_p), f32).at[:, :h1_f].set(w1.astype(f32))
    b1p = jnp.zeros((1, h1_p), f32).at[:, :h1_f].set(b1.astype(f32))
    w2p = jnp.zeros((h1_p, h2_p), f32).at[:h1_f, :h2_f].set(w2.astype(f32))
    b2p = jnp.zeros((1, h2_p), f32).at[:, :h2_f].set(b2.astype(f32))
    w3p = jnp.zeros((h2_p, out_p), f32).at[:h2_f, :out_f].set(w3.astype(f32))
    b3p = jnp.zeros((1, out_p), f32).at[:, :out_f].set(b3.astype(f32))

    # Batch tile: multiple of 8 sublanes, capped at max_block_batch. For large B,
    # also cap at ceil(B/2) so the parallel axis has >=2 steps (v7x: both TCs busy).
    tm = min(_round_up(B, SUBLANE), _round_up(max_block_batch, SUBLANE))
    if B > 2 * SUBLANE:
        tm = min(tm, _round_up(-(-B // 2), SUBLANE))
    grid = (pl.cdiv(B, tm),)

    return pl.pallas_call(
        mlp_kernel,
        out_shape=jax.ShapeDtypeStruct((B, out_f), f32),
        grid=grid,
        in_specs=[
            pl.BlockSpec((tm, in_f), lambda i: (i, 0)),      # streamed x tile (true width)
            pl.BlockSpec((in_f, h1_p), lambda i: (0, 0)),    # VMEM-resident weights/biases
            pl.BlockSpec((1, h1_p), lambda i: (0, 0)),
            pl.BlockSpec((h1_p, h2_p), lambda i: (0, 0)),
            pl.BlockSpec((1, h2_p), lambda i: (0, 0)),
            pl.BlockSpec((h2_p, out_p), lambda i: (0, 0)),
            pl.BlockSpec((1, out_p), lambda i: (0, 0)),
        ],
        out_specs=pl.BlockSpec((tm, out_f), lambda i: (i, 0)),  # true-width output tile
        compiler_params=pltpu.CompilerParams(
            dimension_semantics=("parallel",),  # megacore-shard batch tiles on v7x
        ),
    )(x.astype(f32), w1p, b1p, w2p, b2p, w3p, b3p)


def init_linear(key, fan_in, fan_out):
    # Deterministic init mimicking nn.Linear's U(-1/sqrt(fan_in), 1/sqrt(fan_in)).
    kw, kb = jax.random.split(key)
    bound = 1.0 / jnp.sqrt(fan_in)
    w = jax.random.uniform(kw, (fan_in, fan_out), jnp.float32, -bound, bound)
    b = jax.random.uniform(kb, (1, fan_out), jnp.float32, -bound, bound)
    return w, b


def reference_forward(x, params):
    w1, b1, w2, b2, w3, b3 = params
    h1 = jnp.maximum(x @ w1 + b1, 0.0)
    h2 = jnp.maximum(h1 @ w2 + b2, 0.0)
    return h2 @ w3 + b3


if __name__ == "__main__":
    in_features, h1, h2, out_features = 4, 8, 9, 3
    batch = 8

    key = jax.random.PRNGKey(0)
    k_x, k1, k2, k3 = jax.random.split(key, 4)

    x = jax.random.normal(k_x, (batch, in_features), jnp.float32)
    w1, b1 = init_linear(k1, in_features, h1)
    w2, b2 = init_linear(k2, h1, h2)
    w3, b3 = init_linear(k3, h2, out_features)
    params = (w1, b1, w2, b2, w3, b3)

    out = jax.block_until_ready(mlp_forward(x, params))
    ref = reference_forward(x, params)

    assert out.shape == (batch, out_features), out.shape
    assert jnp.allclose(out, ref, atol=1e-5, rtol=1e-5), "mismatch vs reference"
    print("KERNEL_OK")
</pallas_src>

<mosaic_0001>
module attributes {stable_mosaic.version = 11 : i64} {
  func.func @mlp_kernel(%arg0: i32, %arg1: memref<8x4xf32, #tpu.memory_space<vmem>>, %arg2: memref<4x128xf32, #tpu.memory_space<vmem>>, %arg3: memref<1x128xf32, #tpu.memory_space<vmem>>, %arg4: memref<128x128xf32, #tpu.memory_space<vmem>>, %arg5: memref<1x128xf32, #tpu.memory_space<vmem>>, %arg6: memref<128x128xf32, #tpu.memory_space<vmem>>, %arg7: memref<1x128xf32, #tpu.memory_space<vmem>>, %arg8: memref<8x3xf32, #tpu.memory_space<vmem>>) attributes {dimension_semantics = [#tpu.dimension_semantics<parallel>], iteration_bounds = array<i64: 1>, scalar_prefetch = 0 : i64, scratch_operands = 0 : i64, tpu.core_type = #tpu.core_type<tc>, window_params = [{transform_indices = @transform_0, window_bounds = array<i64: 8, 4>}, {pipeline_mode = #tpu.pipeline_mode<synchronous>, transform_indices = @transform_1, window_bounds = array<i64: 4, 128>}, {pipeline_mode = #tpu.pipeline_mode<synchronous>, transform_indices = @transform_2, window_bounds = array<i64: 1, 128>}, {pipeline_mode = #tpu.pipeline_mode<synchronous>, transform_indices = @transform_3, window_bounds = array<i64: 128, 128>}, {pipeline_mode = #tpu.pipeline_mode<synchronous>, transform_indices = @transform_4, window_bounds = array<i64: 1, 128>}, {pipeline_mode = #tpu.pipeline_mode<synchronous>, transform_indices = @transform_5, window_bounds = array<i64: 128, 128>}, {pipeline_mode = #tpu.pipeline_mode<synchronous>, transform_indices = @transform_6, window_bounds = array<i64: 1, 128>}, {transform_indices = @transform_7, window_bounds = array<i64: 8, 3>}]} {
    %c0 = arith.constant 0 : index
    %c0_0 = arith.constant 0 : index
    %0 = vector.load %arg1[%c0, %c0_0] : memref<8x4xf32, #tpu.memory_space<vmem>>, vector<8x4xf32>
    %c0_1 = arith.constant 0 : index
    %c0_2 = arith.constant 0 : index
    %1 = vector.load %arg2[%c0_1, %c0_2] : memref<4x128xf32, #tpu.memory_space<vmem>>, vector<4x128xf32>
    %cst = arith.constant dense<0.000000e+00> : vector<8x128xf32>
    %2 = tpu.matmul %0, %1, %cst {dimension_numbers = #tpu.dot_dimension_numbers<[1], [0], [0], [1], [0, 0, 1, 1], [], []>} : vector<8x4xf32>, vector<4x128xf32>, vector<8x128xf32> -> vector<8x128xf32>
    %c0_3 = arith.constant 0 : index
    %c0_4 = arith.constant 0 : index
    %3 = vector.load %arg3[%c0_3, %c0_4] : memref<1x128xf32, #tpu.memory_space<vmem>>, vector<1x128xf32>
    %4 = vector.broadcast %3 : vector<1x128xf32> to vector<8x128xf32>
    %5 = arith.addf %2, %4 : vector<8x128xf32>
    %cst_5 = arith.constant 0.000000e+00 : f32
    %6 = vector.broadcast %cst_5 : f32 to vector<8x128xf32>
    %7 = arith.maximumf %5, %6 : vector<8x128xf32>
    %c0_6 = arith.constant 0 : index
    %c0_7 = arith.constant 0 : index
    %8 = vector.load %arg4[%c0_6, %c0_7] : memref<128x128xf32, #tpu.memory_space<vmem>>, vector<128x128xf32>
    %cst_8 = arith.constant dense<0.000000e+00> : vector<8x128xf32>
    %9 = tpu.matmul %7, %8, %cst_8 {dimension_numbers = #tpu.dot_dimension_numbers<[1], [0], [0], [1], [0, 0, 1, 1], [], []>} : vector<8x128xf32>, vector<128x128xf32>, vector<8x128xf32> -> vector<8x128xf32>
    %c0_9 = arith.constant 0 : index
    %c0_10 = arith.constant 0 : index
    %10 = vector.load %arg5[%c0_9, %c0_10] : memref<1x128xf32, #tpu.memory_space<vmem>>, vector<1x128xf32>
    %11 = vector.broadcast %10 : vector<1x128xf32> to vector<8x128xf32>
    %12 = arith.addf %9, %11 : vector<8x128xf32>
    %cst_11 = arith.constant 0.000000e+00 : f32
    %13 = vector.broadcast %cst_11 : f32 to vector<8x128xf32>
    %14 = arith.maximumf %12, %13 : vector<8x128xf32>
    %c0_12 = arith.constant 0 : index
    %c0_13 = arith.constant 0 : index
    %15 = vector.load %arg6[%c0_12, %c0_13] : memref<128x128xf32, #tpu.memory_space<vmem>>, vector<128x128xf32>
    %cst_14 = arith.constant dense<0.000000e+00> : vector<8x128xf32>
    %16 = tpu.matmul %14, %15, %cst_14 {dimension_numbers = #tpu.dot_dimension_numbers<[1], [0], [0], [1], [0, 0, 1, 1], [], []>} : vector<8x128xf32>, vector<128x128xf32>, vector<8x128xf32> -> vector<8x128xf32>
    %c0_15 = arith.constant 0 : index
    %c0_16 = arith.constant 0 : index
    %17 = vector.load %arg7[%c0_15, %c0_16] : memref<1x128xf32, #tpu.memory_space<vmem>>, vector<1x128xf32>
    %18 = vector.broadcast %17 : vector<1x128xf32> to vector<8x128xf32>
    %19 = arith.addf %16, %18 : vector<8x128xf32>
    %20 = vector.extract_strided_slice %19 {offsets = [0, 0], sizes = [8, 3], strides = [1, 1]} : vector<8x128xf32> to vector<8x3xf32>
    %c0_17 = arith.constant 0 : index
    %c0_18 = arith.constant 0 : index
    %21 = vector.load %arg8[%c0_17, %c0_18] : memref<8x3xf32, #tpu.memory_space<vmem>>, vector<8x3xf32>
    tpu.vector_store %arg8[%c0_17, %c0_18], %20 {strides = array<i32>} : memref<8x3xf32, #tpu.memory_space<vmem>>, vector<8x3xf32>,
    return
  }
  func.func @transform_0(%arg0: i32) -> (i32, i32) {
    %c0_i32 = arith.constant 0 : i32
    %c0_i32_0 = arith.constant 0 : i32
    return %arg0, %c0_i32 : i32, i32
  }
  func.func @transform_1(%arg0: i32) -> (i32, i32) {
    %c0_i32 = arith.constant 0 : i32
    %c0_i32_0 = arith.constant 0 : i32
    %c0_i32_1 = arith.constant 0 : i32
    return %c0_i32, %c0_i32_0 : i32, i32
  }
  func.func @transform_2(%arg0: i32) -> (i32, i32) {
    %c0_i32 = arith.constant 0 : i32
    %c0_i32_0 = arith.constant 0 : i32
    %c0_i32_1 = arith.constant 0 : i32
    return %c0_i32, %c0_i32_0 : i32, i32
  }
  func.func @transform_3(%arg0: i32) -> (i32, i32) {
    %c0_i32 = arith.constant 0 : i32
    %c0_i32_0 = arith.constant 0 : i32
    %c0_i32_1 = arith.constant 0 : i32
    return %c0_i32, %c0_i32_0 : i32, i32
  }
  func.func @transform_4(%arg0: i32) -> (i32, i32) {
    %c0_i32 = arith.constant 0 : i32
    %c0_i32_0 = arith.constant 0 : i32
    %c0_i32_1 = arith.constant 0 : i32
    return %c0_i32, %c0_i32_0 : i32, i32
  }
  func.func @transform_5(%arg0: i32) -> (i32, i32) {
    %c0_i32 = arith.constant 0 : i32
    %c0_i32_0 = arith.constant 0 : i32
    %c0_i32_1 = arith.constant 0 : i32
    return %c0_i32, %c0_i32_0 : i32, i32
  }
  func.func @transform_6(%arg0: i32) -> (i32, i32) {
    %c0_i32 = arith.constant 0 : i32
    %c0_i32_0 = arith.constant 0 : i32
    %c0_i32_1 = arith.constant 0 : i32
    return %c0_i32, %c0_i32_0 : i32, i32
  }
  func.func @transform_7(%arg0: i32) -> (i32, i32) {
    %c0_i32 = arith.constant 0 : i32
    %c0_i32_0 = arith.constant 0 : i32
    return %arg0, %c0_i32 : i32, i32
  }
}

</mosaic_0001>

<llo_original>
// kernel: tpu_custom_call.1
$region0: #{tpu_custom_call.1}
  #allocation0 [shape = 'u32[]', space=smem, size = 0x4, offset = 0x4, fixed_abs, tag = 'smem constant byte address 0x4 - core index']
  #allocation1 [shape = 'u32[144,128]{1,0:T(1,128)}', space=vmem, size = 0x12000, scoped, tag = 'internal scratch']
  %s0 = inlined_call_operand.vmem [shape: f32[8,4], index: 0, kind: input, shape index: {}]
  %s1 = inlined_call_operand.vmem [shape: f32[4,128], index: 1, kind: input, shape index: {}]
  %s2 = inlined_call_operand.vmem [shape: f32[1,128], index: 2, kind: input, shape index: {}]
  %s3 = inlined_call_operand.hbm [shape: f32[128,128], index: 3, kind: input, shape index: {}]
  %s4 = inlined_call_operand.vmem [shape: f32[1,128], index: 4, kind: input, shape index: {}]
  %s5 = inlined_call_operand.hbm [shape: f32[128,128], index: 5, kind: input, shape index: {}]
  %s6 = inlined_call_operand.vmem [shape: f32[1,128], index: 6, kind: input, shape index: {}]
  %s7 = inlined_call_operand.vmem [shape: f32[8,3], index: 7, kind: output, shape index: {}]
  %s8 = sld [smem:[#allocation0]]
  $region46: #{tpu_custom_call.1} parent=0
    _
  %s10 = ssub.s32 1, %s8
  %s11 = scalar_select 0, %s10, %s8
  $region1: #{tpu_custom_call.1} parent=0
    #allocation2 [shape = 'u8[65536]{0}', space=vmem, size = 0x10000, scoped, tag = 'input window, operand 3, single buffered']
    #allocation3 [shape = 's32[1]{0}', space=sflag, size = 0x4, scoped, tag = 'scoped memory for tpu_custom_call.1']
    #allocation4 [shape = 'u8[65536]{0}', space=vmem, size = 0x10000, scoped, tag = 'input window, operand 5, single buffered']
    #allocation5 [shape = 's32[1]{0}', space=sflag, size = 0x4, scoped, tag = 'scoped memory for tpu_custom_call.1']
    %12 = vsyncpa [#allocation3], 0
    %13 = vsyncpa [#allocation5], 0
    // Predicated region
    $region2: #{tpu_custom_call.1} parent=1 // pred_check
      _
    $region3: #{tpu_custom_call.1} parent=1 // pred_check_branch
      %15 = sbr.rel (0) target = $region5
    $region4: #{tpu_custom_call.1} parent=1 // pred_region
      _
    $region5: #{tpu_custom_call.1} parent=1 // pred_fallthru
      _
    // Predicated region
    $region6: #{tpu_custom_call.1} parent=1 // pred_check
      _
    $region7: #{tpu_custom_call.1} parent=1 // pred_check_branch
      %17 = sbr.rel (0) target = $region9
    $region8: #{tpu_custom_call.1} parent=1 // pred_region
      _
    $region9: #{tpu_custom_call.1} parent=1 // pred_fallthru
      _
    // Predicated region
    $region10: #{tpu_custom_call.1} parent=1 // pred_check
      _
    $region11: #{tpu_custom_call.1} parent=1 // pred_check_branch
      %19 = sbr.rel (0) target = $region13
    $region12: #{tpu_custom_call.1} parent=1 // pred_region
      _
    $region13: #{tpu_custom_call.1} parent=1 // pred_fallthru
      _
    // Predicated region
    $region14: #{tpu_custom_call.1} parent=1 // pred_check
      _
    $region15: #{tpu_custom_call.1} parent=1 // pred_check_branch
      %21 = sbr.rel (0) target = $region17
    $region16: #{tpu_custom_call.1} parent=1 // pred_region
      %s23 = ssub.s32 2048, 2048
      %24 = vsyncadd [#allocation3], %s23
      %s25 = sshll.u32 [#allocation2], 4
      %s26 = int_to_ptr.vmem [resolvable:$true] %s25
      %31 = dma.hbm_to_vmem [thread:$0]  %s3, 2048, %s26, [#allocation3], 128, 128, 8
    $region17: #{tpu_custom_call.1} parent=1 // pred_fallthru
      _
    // Predicated region
    $region18: #{tpu_custom_call.1} parent=1 // pred_check
      _
    $region19: #{tpu_custom_call.1} parent=1 // pred_check_branch
      %33 = sbr.rel (0) target = $region21
    $region20: #{tpu_custom_call.1} parent=1 // pred_region
      _
    $region21: #{tpu_custom_call.1} parent=1 // pred_fallthru
      _
    // Predicated region
    $region22: #{tpu_custom_call.1} parent=1 // pred_check
      _
    $region23: #{tpu_custom_call.1} parent=1 // pred_check_branch
      %35 = sbr.rel (0) target = $region25
    $region24: #{tpu_custom_call.1} parent=1 // pred_region
      %s37 = ssub.s32 2048, 2048
      %38 = vsyncadd [#allocation5], %s37
      %s39 = sshll.u32 [#allocation4], 4
      %s40 = int_to_ptr.vmem [resolvable:$true] %s39
      %45 = dma.hbm_to_vmem [thread:$0]  %s5, 2048, %s40, [#allocation5], 128, 128, 8
    $region25: #{tpu_custom_call.1} parent=1 // pred_fallthru
      _
    // Predicated region
    $region26: #{tpu_custom_call.1} parent=1 // pred_check
      _
    $region27: #{tpu_custom_call.1} parent=1 // pred_check_branch
      %47 = sbr.rel (0) target = $region29
    $region28: #{tpu_custom_call.1} parent=1 // pred_region
      _
    $region29: #{tpu_custom_call.1} parent=1 // pred_fallthru
      _
    // Predicated region
    $region30: #{tpu_custom_call.1} parent=1 // pred_check
      _
    $region31: #{tpu_custom_call.1} parent=1 // pred_check_branch
      %49 = sbr.rel (0) target = $region33
    $region32: #{tpu_custom_call.1} parent=1 // pred_region
      %50 = dma.done [#allocation3], 2048
    $region33: #{tpu_custom_call.1} parent=1 // pred_fallthru
      _
    // Predicated region
    $region34: #{tpu_custom_call.1} parent=1 // pred_check
      _
    $region35: #{tpu_custom_call.1} parent=1 // pred_check_branch
      %52 = sbr.rel (0) target = $region37
    $region36: #{tpu_custom_call.1} parent=1 // pred_region
      %53 = dma.done [#allocation5], 2048
    $region37: #{tpu_custom_call.1} parent=1 // pred_fallthru
      _
    %v54 = vld [vmem:[%s0] sm:$0xff]
    %v55 = vld [vmem:[%s1] sm:$0xf]
    %v56 = vld [vmem:[%s2] sm:$0x1]
    %v58 = vlaneseq
    %v59 = vshrl.u32 %v58, 7
    %v60 = vsub.s32 0, %v59
    %v61 = vrot.slane %v56, %v60
    %vm63 = vcmask 31744
    %v65 = vsel %vm63, %v54, 0
    %vm67 = vcmask 1043456
    %v69 = vsel %vm67, %v55, 0
    %71 = vmatprep.subr.mxu0 0.0
    %72 = vmatpush1.msra.mxu0 0.0
    %73 = vmatprep.subr.mxu0 0.0
    %74 = vmatpush1.msra.mxu0 0.0
    %75 = vmatprep.subr.mxu0 0.0
    %76 = vmatpush1.msra.mxu0 0.0
    %77 = vmatprep.subr.mxu0 0.0
    %78 = vmatpush1.msra.mxu0 0.0
    %79 = vmatprep.subr.mxu0 0.0
    %80 = vmatpush1.msra.mxu0 0.0
    %81 = vmatprep.subr.mxu0 0.0
    %82 = vmatpush1.msra.mxu0 0.0
    %83 = vmatprep.subr.mxu0 0.0
    %84 = vmatpush1.msra.mxu0 0.0
    %85 = vmatprep.subr.mxu0 0.0
    %86 = vmatpush1.msra.mxu0 0.0
    %87 = vmatprep.subr.mxu0 0.0
    %88 = vmatpush1.msra.mxu0 0.0
    %89 = vmatprep.subr.mxu0 0.0
    %90 = vmatpush1.msra.mxu0 0.0
    %91 = vmatprep.subr.mxu0 0.0
    %92 = vmatpush1.msra.mxu0 0.0
    %93 = vmatprep.subr.mxu0 0.0
    %94 = vmatpush1.msra.mxu0 0.0
    %95 = vmatprep.subr.mxu0 0.0
    %96 = vmatpush1.msra.mxu0 0.0
    %97 = vmatprep.subr.mxu0 0.0
    %98 = vmatpush1.msra.mxu0 0.0
    %99 = vmatprep.subr.mxu0 0.0
    %100 = vmatpush1.msra.mxu0 0.0
    %101 = vmatprep.subr.mxu0 0.0
    %102 = vmatpush1.msra.mxu0 %v69
    %103 = vmatprep.subr.mxu0 0.0
    %104 = vmatpush2.msra.mxu0 0.0
    %105 = vmatprep.subr.mxu0 0.0
    %106 = vmatpush2.msra.mxu0 0.0
    %107 = vmatprep.subr.mxu0 0.0
    %108 = vmatpush2.msra.mxu0 0.0
    %109 = vmatprep.subr.mxu0 0.0
    %110 = vmatpush2.msra.mxu0 0.0
    %111 = vmatprep.subr.mxu0 0.0
    %112 = vmatpush2.msra.mxu0 0.0
    %113 = vmatprep.subr.mxu0 0.0
    %114 = vmatpush2.msra.mxu0 0.0
    %115 = vmatprep.subr.mxu0 0.0
    %116 = vmatpush2.msra.mxu0 0.0
    %117 = vmatprep.subr.mxu0 0.0
    %118 = vmatpush2.msra.mxu0 0.0
    %119 = vmatprep.subr.mxu0 0.0
    %120 = vmatpush2.msra.mxu0 0.0
    %121 = vmatprep.subr.mxu0 0.0
    %122 = vmatpush2.msra.mxu0 0.0
    %123 = vmatprep.subr.mxu0 0.0
    %124 = vmatpush2.msra.mxu0 0.0
    %125 = vmatprep.subr.mxu0 0.0
    %126 = vmatpush2.msra.mxu0 0.0
    %127 = vmatprep.subr.mxu0 0.0
    %128 = vmatpush2.msra.mxu0 0.0
    %129 = vmatprep.subr.mxu0 0.0
    %130 = vmatpush2.msra.mxu0 0.0
    %131 = vmatprep.subr.mxu0 0.0
    %132 = vmatpush2.msra.mxu0 0.0
    %133 = vmatprep.subr.mxu0 0.0
    %134 = vmatpush2.msra.mxu0 0.0
    %135 = vmatprep.mubr.f32.mxu0 0.0
    %136 = vmatmul.mubr.f32.gmra.mxu0 %v65
    %v137 = vpop.f32.mrf.mxu0
    %v138 = vadd.f32 %v61, %v137
    %v139 = vpop.f32.mrf.mxu0
    %140 = vdwg.mxu0
    %v141 = vmax.f32 %v138, 0.0
    %v142 = vld [vmem:[#allocation2] sm:$0xff]
    %v143 = vld [vmem:[#allocation2 + $0x8] sm:$0xff]
    %v144 = vld [vmem:[#allocation2 + $0x10] sm:$0xff]
    %v145 = vld [vmem:[#allocation2 + $0x18] sm:$0xff]
    %v146 = vld [vmem:[#allocation2 + $0x20] sm:$0xff]
    %v147 = vld [vmem:[#allocation2 + $0x28] sm:$0xff]
    %v148 = vld [vmem:[#allocation2 + $0x30] sm:$0xff]
    %v149 = vld [vmem:[#allocation2 + $0x38] sm:$0xff]
    %v150 = vld [vmem:[#allocation2 + $0x40] sm:$0xff]
    %v151 = vld [vmem:[#allocation2 + $0x48] sm:$0xff]
    %v152 = vld [vmem:[#allocation2 + $0x50] sm:$0xff]
    %v153 = vld [vmem:[#allocation2 + $0x58] sm:$0xff]
    %v154 = vld [vmem:[#allocation2 + $0x60] sm:$0xff]
    %v155 = vld [vmem:[#allocation2 + $0x68] sm:$0xff]
    %v156 = vld [vmem:[#allocation2 + $0x70] sm:$0xff]
    %v157 = vld [vmem:[#allocation2 + $0x78] sm:$0xff]
    %v158 = vld [vmem:[%s4] sm:$0x1]
    %v160 = vlaneseq
    %v161 = vshrl.u32 %v160, 7
    %v162 = vsub.s32 0, %v161
    %v163 = vrot.slane %v158, %v162
    %165 = vmatprep.subr.mxu0 0.0
    %166 = vmatpush1.msra.mxu0 %v157
    %167 = vmatprep.subr.mxu0 0.0
    %168 = vmatpush1.msra.mxu0 %v156
    %169 = vmatprep.subr.mxu0 0.0
    %170 = vmatpush1.msra.mxu0 %v155
    %171 = vmatprep.subr.mxu0 0.0
    %172 = vmatpush1.msra.mxu0 %v154
    %173 = vmatprep.subr.mxu0 0.0
    %174 = vmatpush1.msra.mxu0 %v153
    %175 = vmatprep.subr.mxu0 0.0
    %176 = vmatpush1.msra.mxu0 %v152
    %177 = vmatprep.subr.mxu0 0.0
    %178 = vmatpush1.msra.mxu0 %v151
    %179 = vmatprep.subr.mxu0 0.0
    %180 = vmatpush1.msra.mxu0 %v150
    %181 = vmatprep.subr.mxu0 0.0
    %182 = vmatpush1.msra.mxu0 %v149
    %183 = vmatprep.subr.mxu0 0.0
    %184 = vmatpush1.msra.mxu0 %v148
    %185 = vmatprep.subr.mxu0 0.0
    %186 = vmatpush1.msra.mxu0 %v147
    %187 = vmatprep.subr.mxu0 0.0
    %188 = vmatpush1.msra.mxu0 %v146
    %189 = vmatprep.subr.mxu0 0.0
    %190 = vmatpush1.msra.mxu0 %v145
    %191 = vmatprep.subr.mxu0 0.0
    %192 = vmatpush1.msra.mxu0 %v144
    %193 = vmatprep.subr.mxu0 0.0
    %194 = vmatpush1.msra.mxu0 %v143
    %195 = vmatprep.subr.mxu0 0.0
    %196 = vmatpush1.msra.mxu0 %v142
    %197 = vmatprep.subr.mxu0 0.0
    %198 = vmatpush2.msra.mxu0 0.0
    %199 = vmatprep.subr.mxu0 0.0
    %200 = vmatpush2.msra.mxu0 0.0
    %201 = vmatprep.subr.mxu0 0.0
    %202 = vmatpush2.msra.mxu0 0.0
    %203 = vmatprep.subr.mxu0 0.0
    %204 = vmatpush2.msra.mxu0 0.0
    %205 = vmatprep.subr.mxu0 0.0
    %206 = vmatpush2.msra.mxu0 0.0
    %207 = vmatprep.subr.mxu0 0.0
    %208 = vmatpush2.msra.mxu0 0.0
    %209 = vmatprep.subr.mxu0 0.0
    %210 = vmatpush2.msra.mxu0 0.0
    %211 = vmatprep.subr.mxu0 0.0
    %212 = vmatpush2.msra.mxu0 0.0
    %213 = vmatprep.subr.mxu0 0.0
    %214 = vmatpush2.msra.mxu0 0.0
    %215 = vmatprep.subr.mxu0 0.0
    %216 = vmatpush2.msra.mxu0 0.0
    %217 = vmatprep.subr.mxu0 0.0
    %218 = vmatpush2.msra.mxu0 0.0
    %219 = vmatprep.subr.mxu0 0.0
    %220 = vmatpush2.msra.mxu0 0.0
    %221 = vmatprep.subr.mxu0 0.0
    %222 = vmatpush2.msra.mxu0 0.0
    %223 = vmatprep.subr.mxu0 0.0
    %224 = vmatpush2.msra.mxu0 0.0
    %225 = vmatprep.subr.mxu0 0.0
    %226 = vmatpush2.msra.mxu0 0.0
    %227 = vmatprep.subr.mxu0 0.0
    %228 = vmatpush2.msra.mxu0 0.0
    %229 = vmatprep.mubr.f32.mxu0 0.0
    %230 = vmatmul.mubr.f32.gmra.mxu0 %v141
    %v231 = vpop.f32.mrf.mxu0
    %v232 = vadd.f32 %v163, %v231
    %v233 = vpop.f32.mrf.mxu0
    %234 = vdwg.mxu0
    %v235 = vmax.f32 %v232, 0.0
    %v236 = vld [vmem:[#allocation4] sm:$0xff]
    %v237 = vld [vmem:[#allocation4 + $0x8] sm:$0xff]
    %v238 = vld [vmem:[#allocation4 + $0x10] sm:$0xff]
    %v239 = vld [vmem:[#allocation4 + $0x18] sm:$0xff]
    %v240 = vld [vmem:[#allocation4 + $0x20] sm:$0xff]
    %v241 = vld [vmem:[#allocation4 + $0x28] sm:$0xff]
    %v242 = vld [vmem:[#allocation4 + $0x30] sm:$0xff]
    %v243 = vld [vmem:[#allocation4 + $0x38] sm:$0xff]
    %v244 = vld [vmem:[#allocation4 + $0x40] sm:$0xff]
    %v245 = vld [vmem:[#allocation4 + $0x48] sm:$0xff]
    %v246 = vld [vmem:[#allocation4 + $0x50] sm:$0xff]
    %v247 = vld [vmem:[#allocation4 + $0x58] sm:$0xff]
    %v248 = vld [vmem:[#allocation4 + $0x60] sm:$0xff]
    %v249 = vld [vmem:[#allocation4 + $0x68] sm:$0xff]
    %v250 = vld [vmem:[#allocation4 + $0x70] sm:$0xff]
    %v251 = vld [vmem:[#allocation4 + $0x78] sm:$0xff]
    %v252 = vld [vmem:[%s6] sm:$0x1]
    %v254 = vlaneseq
    %v255 = vshrl.u32 %v254, 7
    %v256 = vsub.s32 0, %v255
    %v257 = vrot.slane %v252, %v256
    %259 = vmatprep.subr.mxu0 0.0
    %260 = vmatpush1.msra.mxu0 %v251
    %261 = vmatprep.subr.mxu0 0.0
    %262 = vmatpush1.msra.mxu0 %v250
    %263 = vmatprep.subr.mxu0 0.0
    %264 = vmatpush1.msra.mxu0 %v249
    %265 = vmatprep.subr.mxu0 0.0
    %266 = vmatpush1.msra.mxu0 %v248
    %267 = vmatprep.subr.mxu0 0.0
    %268 = vmatpush1.msra.mxu0 %v247
    %269 = vmatprep.subr.mxu0 0.0
    %270 = vmatpush1.msra.mxu0 %v246
    %271 = vmatprep.subr.mxu0 0.0
    %272 = vmatpush1.msra.mxu0 %v245
    %273 = vmatprep.subr.mxu0 0.0
    %274 = vmatpush1.msra.mxu0 %v244
    %275 = vmatprep.subr.mxu0 0.0
    %276 = vmatpush1.msra.mxu0 %v243
    %277 = vmatprep.subr.mxu0 0.0
    %278 = vmatpush1.msra.mxu0 %v242
    %279 = vmatprep.subr.mxu0 0.0
    %280 = vmatpush1.msra.mxu0 %v241
    %281 = vmatprep.subr.mxu0 0.0
    %282 = vmatpush1.msra.mxu0 %v240
    %283 = vmatprep.subr.mxu0 0.0
    %284 = vmatpush1.msra.mxu0 %v239
    %285 = vmatprep.subr.mxu0 0.0
    %286 = vmatpush1.msra.mxu0 %v238
    %287 = vmatprep.subr.mxu0 0.0
    %288 = vmatpush1.msra.mxu0 %v237
    %289 = vmatprep.subr.mxu0 0.0
    %290 = vmatpush1.msra.mxu0 %v236
    %291 = vmatprep.subr.mxu0 0.0
    %292 = vmatpush2.msra.mxu0 0.0
    %293 = vmatprep.subr.mxu0 0.0
    %294 = vmatpush2.msra.mxu0 0.0
    %295 = vmatprep.subr.mxu0 0.0
    %296 = vmatpush2.msra.mxu0 0.0
    %297 = vmatprep.subr.mxu0 0.0
    %298 = vmatpush2.msra.mxu0 0.0
    %299 = vmatprep.subr.mxu0 0.0
    %300 = vmatpush2.msra.mxu0 0.0
    %301 = vmatprep.subr.mxu0 0.0
    %302 = vmatpush2.msra.mxu0 0.0
    %303 = vmatprep.subr.mxu0 0.0
    %304 = vmatpush2.msra.mxu0 0.0
    %305 = vmatprep.subr.mxu0 0.0
    %306 = vmatpush2.msra.mxu0 0.0
    %307 = vmatprep.subr.mxu0 0.0
    %308 = vmatpush2.msra.mxu0 0.0
    %309 = vmatprep.subr.mxu0 0.0
    %310 = vmatpush2.msra.mxu0 0.0
    %311 = vmatprep.subr.mxu0 0.0
    %312 = vmatpush2.msra.mxu0 0.0
    %313 = vmatprep.subr.mxu0 0.0
    %314 = vmatpush2.msra.mxu0 0.0
    %315 = vmatprep.subr.mxu0 0.0
    %316 = vmatpush2.msra.mxu0 0.0
    %317 = vmatprep.subr.mxu0 0.0
    %318 = vmatpush2.msra.mxu0 0.0
    %319 = vmatprep.subr.mxu0 0.0
    %320 = vmatpush2.msra.mxu0 0.0
    %321 = vmatprep.subr.mxu0 0.0
    %322 = vmatpush2.msra.mxu0 0.0
    %323 = vmatprep.mubr.f32.mxu0 0.0
    %324 = vmatmul.mubr.f32.gmra.mxu0 %v235
    %v325 = vpop.f32.mrf.mxu0
    %v326 = vadd.f32 %v257, %v325
    %v327 = vpop.f32.mrf.mxu0
    %328 = vdwg.mxu0
    %vm329 = vcmask 23552
    %330 = vst.msk [vmem:[%s7] sm:$0xff] %vm329, %v326
    // Predicated region
    $region38: #{tpu_custom_call.1} parent=1 // pred_check
      _
    $region39: #{tpu_custom_call.1} parent=1 // pred_check_branch
      %332 = sbr.rel (0) target = $region41
    $region40: #{tpu_custom_call.1} parent=1 // pred_region
      _
    $region41: #{tpu_custom_call.1} parent=1 // pred_fallthru
      _
    // Predicated region
    $region42: #{tpu_custom_call.1} parent=1 // pred_check
      _
    $region43: #{tpu_custom_call.1} parent=1 // pred_check_branch
      %334 = sbr.rel (0) target = $region45
    $region44: #{tpu_custom_call.1} parent=1 // pred_region
      _
    $region45: #{tpu_custom_call.1} parent=1 // pred_fallthru
      _
    %335 = vsyncpa [#allocation3], 1
    %336 = vsyncpa [#allocation5], 1

</llo_original>
